<compile_context>
chip_gen: v7x
topology: tpu7x:2x2x1
jax: 0.10.0
libtpu: 0.0.40
codegen_flags: <defaults>
</compile_context>

<pallas_src>
import jax
import jax.numpy as jnp
from jax.experimental import pallas as pl
from jax.experimental.pallas import tpu as pltpu


def _round_up(x, m):
    return ((x + m - 1) // m) * m


def _conv_bn_relu_kernel(x_ref, w_ref, scale_ref, shift_ref, o_ref):
    # x_ref:     (TM, K_pad)        bf16 im2col rows (one row per output pixel)
    # w_ref:     (K_pad, Cout_pad)  bf16 reshaped conv weights
    # scale_ref: (1, Cout_pad)      f32 folded BN scale = gamma / sqrt(var + eps)
    # shift_ref: (1, Cout_pad)      f32 folded shift    = beta - mean*scale + bias*scale
    # o_ref:     (TM, Cout_pad)     lane-dense output block
    acc = jnp.dot(x_ref[...], w_ref[...], preferred_element_type=jnp.float32)
    acc = acc * scale_ref[...] + shift_ref[...]              # fused BN (+ folded conv bias)
    o_ref[...] = jnp.maximum(acc, 0.0).astype(o_ref.dtype)   # ReLU


def conv_block_forward(x_nchw, w_oihw, bias, gamma, beta, run_mean, run_var,
                       eps=1e-5, tm=256):
    """Forward of ConvBlock. x_nchw: (N, Cin, H, W). Returns (N, Cout, H, W)."""
    N, Cin, H, W = x_nchw.shape
    Cout = w_oihw.shape[0]
    K = 9 * Cin

    LANE, SUBLANE = 128, 8
    cout_pad = _round_up(Cout, LANE)   # lane-dense output stores
    k_pad = _round_up(K, SUBLANE)      # sublane-aligned weight tile

    # ---- glue in plain JAX: layout change, spatial pad, im2col, BN/bias folding ----
    x_nhwc = jnp.transpose(x_nchw, (0, 2, 3, 1)).astype(jnp.bfloat16)   # NCHW -> NHWC, bf16 MXU feed
    x_sp = jnp.pad(x_nhwc, ((0, 0), (1, 1), (1, 1), (0, 0)))            # pad=1 on H, W
    # im2col: feature index = (kh*3 + kw) * Cin + cin
    cols = [x_sp[:, kh:kh + H, kw:kw + W, :] for kh in range(3) for kw in range(3)]
    x_cols = jnp.concatenate(cols, axis=-1).reshape(N * H * W, K)

    R = N * H * W
    TM = min(_round_up(R, SUBLANE), _round_up(tm, SUBLANE))
    r_pad = _round_up(R, TM)
    x_cols = jnp.pad(x_cols, ((0, r_pad - R), (0, k_pad - K)))

    # weights: OIHW -> (kh, kw, cin, cout) -> (9*Cin, Cout), matching the im2col order
    w_mat = jnp.transpose(w_oihw, (2, 3, 1, 0)).reshape(K, Cout)
    w_mat = jnp.pad(w_mat, ((0, k_pad - K), (0, cout_pad - Cout))).astype(jnp.bfloat16)

    # fold conv bias into the BN shift:  (acc + b)*s + t == acc*s + (b*s + t)
    scale = gamma / jnp.sqrt(run_var + eps)
    shift = beta - run_mean * scale + bias * scale
    scale2 = jnp.pad(scale, (0, cout_pad - Cout)).reshape(1, cout_pad).astype(jnp.float32)
    shift2 = jnp.pad(shift, (0, cout_pad - Cout)).reshape(1, cout_pad).astype(jnp.float32)

    out = pl.pallas_call(
        _conv_bn_relu_kernel,
        out_shape=jax.ShapeDtypeStruct((r_pad, cout_pad), x_nchw.dtype),
        grid_spec=pltpu.PrefetchScalarGridSpec(
            num_scalar_prefetch=0,
            grid=(r_pad // TM,),
            in_specs=[
                pl.BlockSpec((TM, k_pad), lambda m: (m, 0)),
                pl.BlockSpec((k_pad, cout_pad), lambda m: (0, 0)),
                pl.BlockSpec((1, cout_pad), lambda m: (0, 0)),
                pl.BlockSpec((1, cout_pad), lambda m: (0, 0)),
            ],
            out_specs=pl.BlockSpec((TM, cout_pad), lambda m: (m, 0)),
        ),
        compiler_params=pltpu.CompilerParams(dimension_semantics=("parallel",)),
    )(x_cols, w_mat, scale2, shift2)

    out = out[:R, :Cout].reshape(N, H, W, Cout)
    return jnp.transpose(out, (0, 3, 1, 2))  # NHWC -> NCHW


def _reference(x_nchw, w_oihw, bias, gamma, beta, run_mean, run_var, eps=1e-5):
    """Pure-JAX f32 reference (NCHW conv + eval-mode BN + ReLU)."""
    y = jax.lax.conv_general_dilated(
        x_nchw, w_oihw, window_strides=(1, 1), padding=((1, 1), (1, 1)),
        dimension_numbers=("NCHW", "OIHW", "NCHW"))
    y = y + bias[None, :, None, None]
    scale = gamma / jnp.sqrt(run_var + eps)
    shift = beta - run_mean * scale
    y = y * scale[None, :, None, None] + shift[None, :, None, None]
    return jnp.maximum(y, 0.0)


if __name__ == "__main__":
    key = jax.random.PRNGKey(0)
    N, Cin, Cout, H, W = 2, 4, 8, 16, 16

    k_x, k_w, k_b, k_g, k_be, k_m, k_v = jax.random.split(key, 7)
    x = jax.random.normal(k_x, (N, Cin, H, W), dtype=jnp.float32)

    # Deterministic parameter init (shapes from nn.Conv2d / nn.BatchNorm2d).
    w = jax.random.normal(k_w, (Cout, Cin, 3, 3), dtype=jnp.float32) * 0.1
    b = jax.random.normal(k_b, (Cout,), dtype=jnp.float32) * 0.05
    gamma = 1.0 + 0.1 * jax.random.normal(k_g, (Cout,), dtype=jnp.float32)
    beta = 0.05 * jax.random.normal(k_be, (Cout,), dtype=jnp.float32)
    run_mean = 0.1 * jax.random.normal(k_m, (Cout,), dtype=jnp.float32)
    run_var = jnp.abs(1.0 + 0.1 * jax.random.normal(k_v, (Cout,), dtype=jnp.float32))

    out = conv_block_forward(x, w, b, gamma, beta, run_mean, run_var)
    out = jax.block_until_ready(out)

    ref = _reference(x, w, b, gamma, beta, run_mean, run_var)
    assert out.shape == (N, Cout, H, W)
    # bf16 MXU inputs (f32 accumulate) -> tolerance loosened vs the all-f32 path.
    assert jnp.allclose(out, ref, atol=5e-2, rtol=5e-2), "mismatch vs reference"

    print("KERNEL_OK")
</pallas_src>

<mosaic_0001>
module attributes {stable_mosaic.version = 11 : i64} {
  func.func @_conv_bn_relu_kernel(%arg0: i32, %arg1: memref<256x40xbf16, #tpu.memory_space<vmem>>, %arg2: memref<40x128xbf16, #tpu.memory_space<vmem>>, %arg3: memref<1x128xf32, #tpu.memory_space<vmem>>, %arg4: memref<1x128xf32, #tpu.memory_space<vmem>>, %arg5: memref<256x128xf32, #tpu.memory_space<vmem>>) attributes {dimension_semantics = [#tpu.dimension_semantics<parallel>], iteration_bounds = array<i64: 2>, scalar_prefetch = 0 : i64, scratch_operands = 0 : i64, tpu.core_type = #tpu.core_type<tc>, window_params = [{transform_indices = @transform_0, window_bounds = array<i64: 256, 40>}, {pipeline_mode = #tpu.pipeline_mode<synchronous>, transform_indices = @transform_1, window_bounds = array<i64: 40, 128>}, {pipeline_mode = #tpu.pipeline_mode<synchronous>, transform_indices = @transform_2, window_bounds = array<i64: 1, 128>}, {pipeline_mode = #tpu.pipeline_mode<synchronous>, transform_indices = @transform_3, window_bounds = array<i64: 1, 128>}, {transform_indices = @transform_4, window_bounds = array<i64: 256, 128>}]} {
    %c0 = arith.constant 0 : index
    %c0_0 = arith.constant 0 : index
    %0 = vector.load %arg1[%c0, %c0_0] : memref<256x40xbf16, #tpu.memory_space<vmem>>, vector<256x40xbf16>
    %c0_1 = arith.constant 0 : index
    %c0_2 = arith.constant 0 : index
    %1 = vector.load %arg2[%c0_1, %c0_2] : memref<40x128xbf16, #tpu.memory_space<vmem>>, vector<40x128xbf16>
    %cst = arith.constant dense<0.000000e+00> : vector<256x128xf32>
    %2 = tpu.matmul %0, %1, %cst {dimension_numbers = #tpu.dot_dimension_numbers<[1], [0], [0], [1], [0, 0, 1, 1], [], []>} : vector<256x40xbf16>, vector<40x128xbf16>, vector<256x128xf32> -> vector<256x128xf32>
    %c0_3 = arith.constant 0 : index
    %c0_4 = arith.constant 0 : index
    %3 = vector.load %arg3[%c0_3, %c0_4] : memref<1x128xf32, #tpu.memory_space<vmem>>, vector<1x128xf32>
    %4 = vector.broadcast %3 : vector<1x128xf32> to vector<256x128xf32>
    %5 = arith.mulf %2, %4 : vector<256x128xf32>
    %c0_5 = arith.constant 0 : index
    %c0_6 = arith.constant 0 : index
    %6 = vector.load %arg4[%c0_5, %c0_6] : memref<1x128xf32, #tpu.memory_space<vmem>>, vector<1x128xf32>
    %7 = vector.broadcast %6 : vector<1x128xf32> to vector<256x128xf32>
    %8 = arith.addf %5, %7 : vector<256x128xf32>
    %cst_7 = arith.constant 0.000000e+00 : f32
    %9 = vector.broadcast %cst_7 : f32 to vector<256x128xf32>
    %10 = arith.maximumf %8, %9 : vector<256x128xf32>
    %c0_8 = arith.constant 0 : index
    %c0_9 = arith.constant 0 : index
    %11 = vector.load %arg5[%c0_8, %c0_9] : memref<256x128xf32, #tpu.memory_space<vmem>>, vector<256x128xf32>
    tpu.vector_store %arg5[%c0_8, %c0_9], %10 {strides = array<i32>} : memref<256x128xf32, #tpu.memory_space<vmem>>, vector<256x128xf32>,
    return
  }
  func.func @transform_0(%arg0: i32) -> (i32, i32) {
    %c0_i32 = arith.constant 0 : i32
    %c0_i32_0 = arith.constant 0 : i32
    return %arg0, %c0_i32 : i32, i32
  }
  func.func @transform_1(%arg0: i32) -> (i32, i32) {
    %c0_i32 = arith.constant 0 : i32
    %c0_i32_0 = arith.constant 0 : i32
    %c0_i32_1 = arith.constant 0 : i32
    return %c0_i32, %c0_i32_0 : i32, i32
  }
  func.func @transform_2(%arg0: i32) -> (i32, i32) {
    %c0_i32 = arith.constant 0 : i32
    %c0_i32_0 = arith.constant 0 : i32
    %c0_i32_1 = arith.constant 0 : i32
    return %c0_i32, %c0_i32_0 : i32, i32
  }
  func.func @transform_3(%arg0: i32) -> (i32, i32) {
    %c0_i32 = arith.constant 0 : i32
    %c0_i32_0 = arith.constant 0 : i32
    %c0_i32_1 = arith.constant 0 : i32
    return %c0_i32, %c0_i32_0 : i32, i32
  }
  func.func @transform_4(%arg0: i32) -> (i32, i32) {
    %c0_i32 = arith.constant 0 : i32
    %c0_i32_0 = arith.constant 0 : i32
    return %arg0, %c0_i32 : i32, i32
  }
}

</mosaic_0001>

<llo_original>
// kernel: tpu_custom_call.1
$region0: #{tpu_custom_call.1}
  #allocation0 [shape = 'u32[]', space=smem, size = 0x4, offset = 0x4, fixed_abs, tag = 'smem constant byte address 0x4 - core index']
  #allocation1 [shape = 'u32[144,128]{1,0:T(1,128)}', space=vmem, size = 0x12000, scoped, tag = 'internal scratch']
  %s0 = inlined_call_operand.vmem [shape: bf16[512,40], index: 0, kind: input, shape index: {}]
  %s1 = inlined_call_operand.vmem [shape: bf16[40,128], index: 1, kind: input, shape index: {}]
  %s2 = inlined_call_operand.vmem [shape: f32[1,128], index: 2, kind: input, shape index: {}]
  %s3 = inlined_call_operand.vmem [shape: f32[1,128], index: 3, kind: input, shape index: {}]
  %s4 = inlined_call_operand.hbm [shape: f32[512,128], index: 4, kind: output, shape index: {}]
  %s5 = sld [smem:[#allocation0]]
  $region49: #{tpu_custom_call.1} parent=0
    _
  %s7 = ssub.s32 1, %s5
  %s8 = scalar_select 0, %s7, %s5
  $region1: #{tpu_custom_call.1} parent=0
    #allocation2 [shape = 'u8[262144]{0}', space=vmem, size = 0x40000, scoped, tag = 'output window, operand 0']
    #allocation3 [shape = 's32[2]{0}', space=sflag, size = 0x8, scoped, tag = 'scoped memory for tpu_custom_call.1']
    %9 = vsyncpa [#allocation3], 0
    %s10 = scalar_lea.sflag [#allocation3], 1
    %11 = vsyncpa %s10, 0
    loop: start=0, step=1, limit=4
    $region2: #{tpu_custom_call.1} parent=1 // loop_pre_header
      _
    $region3: #{tpu_custom_call.1} parent=1 // loop_header
      %s13 = sphi 0, %s17
      %p14 = scmp.ge.s32.totalorder %s13, 4
      %s23 = sphi 0, %s25
      %s26 = sphi 0, %s23
      %s27 = sphi 0, %s26
      %s43 = sphi 0, %s27
      %s47 = sphi 0, %s47
      %s49 = sphi 0, %s47
      %s50 = sphi 0, %s49
      %s64 = sphi 0, %s50
      %s68 = sphi 0, %s68
      %s70 = sphi 0, %s68
      %s71 = sphi 0, %s70
      %s85 = sphi 0, %s71
      %s89 = sphi 0, %s89
      %s91 = sphi 0, %s89
      %s92 = sphi 0, %s91
      %s106 = sphi 0, %s92
      %s112 = sphi 0, %s114
      %s115 = sphi 0, %s112
      %s116 = sphi 0, %s115
      %s132 = sphi 0, %s116
    $region4: #{tpu_custom_call.1} parent=1 // loop_header_branch
      %16 = sbr.rel (%p14) target = $region8
    $region5: #{tpu_custom_call.1} parent=1 // loop_body
      %s18 = ssub.s32 %s13, 1
      %s19 = ssub.s32 %s13, 2
      %s20 = sadd.s32 %s13, 1
      %s21 = ssub.s32 %s13, %s20
      %p22 = scmp.eq.s32.totalorder %s21, 0
      %s24 = sadd.s32 %s23, 1
      %s25 = scalar_select %p22, %s23, %s24
      %p28 = pneg %p22
      %p29 = scmp.eq.s32.totalorder %s13, 1
      %p30 = por %p28, %p29
      %p31 = scmp.ne.s32.totalorder %s23, %s26
      %p32 = scmp.eq.s32.totalorder %s13, 0
      %p33 = por %p31, %p32
      %p34 = scmp.ne.s32.totalorder %s23, %s26
      %p35 = scmp.eq.s32.totalorder %s18, 1
      %p36 = por %p34, %p35
      %p37 = scmp.ne.s32.totalorder %s26, %s27
      %p38 = scmp.eq.s32.totalorder %s18, 0
      %p39 = por %p37, %p38
      %p40 = scmp.ne.s32.totalorder %s26, %s27
      %p41 = scmp.eq.s32.totalorder %s19, 1
      %p42 = por %p40, %p41
      %p44 = scmp.ne.s32.totalorder %s27, %s43
      %p45 = scmp.eq.s32.totalorder %s19, 0
      %p46 = por %p44, %p45
      %s48 = sadd.s32 %s47, 1
      %p51 = scmp.eq.s32.totalorder %s13, 1
      %p52 = scmp.ne.s32.totalorder %s47, %s49
      %p53 = scmp.eq.s32.totalorder %s13, 0
      %p54 = por %p52, %p53
      %p55 = scmp.ne.s32.totalorder %s47, %s49
      %p56 = scmp.eq.s32.totalorder %s18, 1
      %p57 = por %p55, %p56
      %p58 = scmp.ne.s32.totalorder %s49, %s50
      %p59 = scmp.eq.s32.totalorder %s18, 0
      %p60 = por %p58, %p59
      %p61 = scmp.ne.s32.totalorder %s49, %s50
      %p62 = scmp.eq.s32.totalorder %s19, 1
      %p63 = por %p61, %p62
      %p65 = scmp.ne.s32.totalorder %s50, %s64
      %p66 = scmp.eq.s32.totalorder %s19, 0
      %p67 = por %p65, %p66
      %s69 = sadd.s32 %s68, 1
      %p72 = scmp.eq.s32.totalorder %s13, 1
      %p73 = scmp.ne.s32.totalorder %s68, %s70
      %p74 = scmp.eq.s32.totalorder %s13, 0
      %p75 = por %p73, %p74
      %p76 = scmp.ne.s32.totalorder %s68, %s70
      %p77 = scmp.eq.s32.totalorder %s18, 1
      %p78 = por %p76, %p77
      %p79 = scmp.ne.s32.totalorder %s70, %s71
      %p80 = scmp.eq.s32.totalorder %s18, 0
      %p81 = por %p79, %p80
      %p82 = scmp.ne.s32.totalorder %s70, %s71
      %p83 = scmp.eq.s32.totalorder %s19, 1
      %p84 = por %p82, %p83
      %p86 = scmp.ne.s32.totalorder %s71, %s85
      %p87 = scmp.eq.s32.totalorder %s19, 0
      %p88 = por %p86, %p87
      %s90 = sadd.s32 %s89, 1
      %p93 = scmp.eq.s32.totalorder %s13, 1
      %p94 = scmp.ne.s32.totalorder %s89, %s91
      %p95 = scmp.eq.s32.totalorder %s13, 0
      %p96 = por %p94, %p95
      %p97 = scmp.ne.s32.totalorder %s89, %s91
      %p98 = scmp.eq.s32.totalorder %s18, 1
      %p99 = por %p97, %p98
      %p100 = scmp.ne.s32.totalorder %s91, %s92
      %p101 = scmp.eq.s32.totalorder %s18, 0
      %p102 = por %p100, %p101
      %p103 = scmp.ne.s32.totalorder %s91, %s92
      %p104 = scmp.eq.s32.totalorder %s19, 1
      %p105 = por %p103, %p104
      %p107 = scmp.ne.s32.totalorder %s92, %s106
      %p108 = scmp.eq.s32.totalorder %s19, 0
      %p109 = por %p107, %p108
      %s110 = ssub.s32 %s13, %s20
      %p111 = scmp.eq.s32.totalorder %s110, 0
      %s113 = sadd.s32 %s112, 1
      %s114 = scalar_select %p111, %s112, %s113
      %p117 = pneg %p111
      %p118 = scmp.eq.s32.totalorder %s13, 1
      %p119 = por %p117, %p118
      %p120 = scmp.ne.s32.totalorder %s112, %s115
      %p121 = scmp.eq.s32.totalorder %s13, 0
      %p122 = por %p120, %p121
      %p123 = scmp.ne.s32.totalorder %s112, %s115
      %p124 = scmp.eq.s32.totalorder %s18, 1
      %p125 = por %p123, %p124
      %p126 = scmp.ne.s32.totalorder %s115, %s116
      %p127 = scmp.eq.s32.totalorder %s18, 0
      %p128 = por %p126, %p127
      %p129 = scmp.ne.s32.totalorder %s115, %s116
      %p130 = scmp.eq.s32.totalorder %s19, 1
      %p131 = por %p129, %p130
      %p133 = scmp.ne.s32.totalorder %s116, %s132
      %p134 = scmp.eq.s32.totalorder %s19, 0
      %p135 = por %p133, %p134
      %p136 = scmp.le.s32.totalorder 1, %s13
      %p137 = scmp.lt.s32.totalorder %s13, 3
      %p138 = pnand %p136, %p137
      %p139 = pneg %p138
      // Predicated region
      $region9: #{tpu_custom_call.1} parent=5 // pred_check
        _
      $region10: #{tpu_custom_call.1} parent=5 // pred_check_branch
        %141 = sbr.rel (%p138) target = $region12
      $region11: #{tpu_custom_call.1} parent=5 // pred_region
        %s142 = ssub.s32 %s13, 1
        // Predicated region
        $region13: #{tpu_custom_call.1} parent=11 // pred_check
          %p143 = pneg %p60
        $region14: #{tpu_custom_call.1} parent=11 // pred_check_branch
          %145 = sbr.rel (%p143) target = $region16
        $region15: #{tpu_custom_call.1} parent=11 // pred_region
          _
        $region16: #{tpu_custom_call.1} parent=11 // pred_fallthru
          _
        // Predicated region
        $region17: #{tpu_custom_call.1} parent=11 // pred_check
          %p146 = pneg %p81
        $region18: #{tpu_custom_call.1} parent=11 // pred_check_branch
          %148 = sbr.rel (%p146) target = $region20
        $region19: #{tpu_custom_call.1} parent=11 // pred_region
          _
        $region20: #{tpu_custom_call.1} parent=11 // pred_fallthru
          _
        // Predicated region
        $region21: #{tpu_custom_call.1} parent=11 // pred_check
          %p149 = pneg %p102
        $region22: #{tpu_custom_call.1} parent=11 // pred_check_branch
          %151 = sbr.rel (%p149) target = $region24
        $region23: #{tpu_custom_call.1} parent=11 // pred_region
          _
        $region24: #{tpu_custom_call.1} parent=11 // pred_fallthru
          _
      $region12: #{tpu_custom_call.1} parent=5 // pred_fallthru
        _
      %p152 = scmp.lt.s32.totalorder %s13, 2
      // Predicated region
      $region25: #{tpu_custom_call.1} parent=5 // pred_check
        %p153 = pneg %p152
      $region26: #{tpu_custom_call.1} parent=5 // pred_check_branch
        %155 = sbr.rel (%p153) target = $region28
      $region27: #{tpu_custom_call.1} parent=5 // pred_region
        // Predicated region
        $region29: #{tpu_custom_call.1} parent=27 // pred_check
          %p156 = pneg %p33
        $region30: #{tpu_custom_call.1} parent=27 // pred_check_branch
          %158 = sbr.rel (%p156) target = $region32
        $region31: #{tpu_custom_call.1} parent=27 // pred_region
          %s159 = smul.u32 32, %s13
          %p160 = scmp.lt.s32.totalorder %s159, 63
          %s161 = scalar_select %p160, %s159, 63
          %s162 = smul.addr %s161, 4
          %s163 = scalar_lea.vmem %s0, %s162
          %s164 = smul.u32 32, %s13
        $region32: #{tpu_custom_call.1} parent=27 // pred_fallthru
          _
      $region28: #{tpu_custom_call.1} parent=5 // pred_fallthru
        _
      %p165 = scmp.le.s32.totalorder 1, %s13
      %p166 = scmp.lt.s32.totalorder %s13, 3
      %p167 = pnand %p165, %p166
      %p168 = pneg %p167
      // Predicated region
      $region33: #{tpu_custom_call.1} parent=5 // pred_check
        _
      $region34: #{tpu_custom_call.1} parent=5 // pred_check_branch
        %170 = sbr.rel (%p167) target = $region36
      $region35: #{tpu_custom_call.1} parent=5 // pred_region
        %s171 = ssub.s32 %s13, 1
        %s172 = smul.u32 32, %s18
        %p173 = scmp.lt.s32.totalorder %s172, 63
        %s174 = scalar_select %p173, %s172, 63
        %s175 = smul.addr %s174, 4
        %s176 = scalar_lea.vmem %s0, %s175
        %p177 = pneg %p39
        %p178 = pneg %p36
        %p179 = pneg %p60
        %p180 = pneg %p57
        %p181 = pneg %p81
        %p182 = pneg %p78
        %p183 = pneg %p102
        %p184 = pneg %p99
        %p185 = pneg %p128
        %p186 = pneg %p125
        %s187 = sand.u32 %s115, 1
        %s188 = scalar_lea.sflag [#allocation3], %s187
        %s189 = sand.u32 %s115, 1
        %s190 = smul.addr %s189, 256
        %s191 = scalar_lea.vmem [#allocation2], %s190
        %s192 = smul.u32 32, %s18
        %p193 = scmp.lt.s32.totalorder %s192, 63
        %s194 = scalar_select %p193, %s192, 63
        %s195 = smul.addr %s194, 4
        %s196 = scalar_lea.vmem %s0, %s195
        %s197 = smul.u32 32, %s18
        %s198 = smul.u32 32, %s18
        %v200 = vld [vmem:[%s196] sm:$0xf]
        %v201 = vld [vmem:[%s196 + $0x4] sm:$0xf]
        %v202 = vld [vmem:[%s196 + $0x8] sm:$0xf]
        %v203 = vld [vmem:[%s196 + $0xc] sm:$0xf]
        %v204 = vld [vmem:[%s196 + $0x10] sm:$0xf]
        %v205 = vld [vmem:[%s196 + $0x14] sm:$0xf]
        %v206 = vld [vmem:[%s196 + $0x18] sm:$0xf]
        %v207 = vld [vmem:[%s196 + $0x1c] sm:$0xf]
        %v208 = vld [vmem:[%s196 + $0x20] sm:$0xf]
        %v209 = vld [vmem:[%s196 + $0x24] sm:$0xf]
        %v210 = vld [vmem:[%s196 + $0x28] sm:$0xf]
        %v211 = vld [vmem:[%s196 + $0x2c] sm:$0xf]
        %v212 = vld [vmem:[%s196 + $0x30] sm:$0xf]
        %v213 = vld [vmem:[%s196 + $0x34] sm:$0xf]
        %v214 = vld [vmem:[%s196 + $0x38] sm:$0xf]
        %v215 = vld [vmem:[%s196 + $0x3c] sm:$0xf]
        %v216 = vld [vmem:[%s196 + $0x40] sm:$0xf]
        %v217 = vld [vmem:[%s196 + $0x44] sm:$0xf]
        %v218 = vld [vmem:[%s196 + $0x48] sm:$0xf]
        %v219 = vld [vmem:[%s196 + $0x4c] sm:$0xf]
        %v220 = vld [vmem:[%s196 + $0x50] sm:$0xf]
        %v221 = vld [vmem:[%s196 + $0x54] sm:$0xf]
        %v222 = vld [vmem:[%s196 + $0x58] sm:$0xf]
        %v223 = vld [vmem:[%s196 + $0x5c] sm:$0xf]
        %v224 = vld [vmem:[%s196 + $0x60] sm:$0xf]
        %v225 = vld [vmem:[%s196 + $0x64] sm:$0xf]
        %v226 = vld [vmem:[%s196 + $0x68] sm:$0xf]
        %v227 = vld [vmem:[%s196 + $0x6c] sm:$0xf]
        %v228 = vld [vmem:[%s196 + $0x70] sm:$0xf]
        %v229 = vld [vmem:[%s196 + $0x74] sm:$0xf]
        %v230 = vld [vmem:[%s196 + $0x78] sm:$0xf]
        %v231 = vld [vmem:[%s196 + $0x7c] sm:$0xf]
        %v232 = vld [vmem:[%s1] sm:$0xf]
        %v233 = vld [vmem:[%s1 + $0x4] sm:$0xf]
        %v234 = vld [vmem:[%s1 + $0x8] sm:$0xf]
        %v235 = vld [vmem:[%s1 + $0xc] sm:$0xf]
        %v236 = vld [vmem:[%s1 + $0x10] sm:$0xf]
        %v269 = vunpack.c.l.b16 %v200
        %v270 = vunpack.c.l.b16 %v201
        %v271 = vunpack.c.l.b16 %v202
        %v272 = vunpack.c.l.b16 %v203
        %v273 = vunpack.c.l.b16 %v204
        %v274 = vunpack.c.l.b16 %v205
        %v275 = vunpack.c.l.b16 %v206
        %v276 = vunpack.c.l.b16 %v207
        %v277 = vunpack.c.l.b16 %v208
        %v278 = vunpack.c.l.b16 %v209
        %v279 = vunpack.c.l.b16 %v210
        %v280 = vunpack.c.l.b16 %v211
        %v281 = vunpack.c.l.b16 %v212
        %v282 = vunpack.c.l.b16 %v213
        %v283 = vunpack.c.l.b16 %v214
        %v284 = vunpack.c.l.b16 %v215
        %v285 = vunpack.c.l.b16 %v216
        %v286 = vunpack.c.l.b16 %v217
        %v287 = vunpack.c.l.b16 %v218
        %v288 = vunpack.c.l.b16 %v219
        %v289 = vunpack.c.l.b16 %v220
        %v290 = vunpack.c.l.b16 %v221
        %v291 = vunpack.c.l.b16 %v222
        %v292 = vunpack.c.l.b16 %v223
        %v293 = vunpack.c.l.b16 %v224
        %v294 = vunpack.c.l.b16 %v225
        %v295 = vunpack.c.l.b16 %v226
        %v296 = vunpack.c.l.b16 %v227
        %v297 = vunpack.c.l.b16 %v228
        %v298 = vunpack.c.l.b16 %v229
        %v299 = vunpack.c.l.b16 %v230
        %v300 = vunpack.c.l.b16 %v231
        %v301 = vpack.c.b16 %v270, %v269
        %v302 = vpack.c.b16 %v272, %v271
        %v303 = vpack.c.b16 %v274, %v273
        %v304 = vpack.c.b16 %v276, %v275
        %v305 = vpack.c.b16 %v278, %v277
        %v306 = vpack.c.b16 %v280, %v279
        %v307 = vpack.c.b16 %v282, %v281
        %v308 = vpack.c.b16 %v284, %v283
        %v309 = vpack.c.b16 %v286, %v285
        %v310 = vpack.c.b16 %v288, %v287
        %v311 = vpack.c.b16 %v290, %v289
        %v312 = vpack.c.b16 %v292, %v291
        %v313 = vpack.c.b16 %v294, %v293
        %v314 = vpack.c.b16 %v296, %v295
        %v315 = vpack.c.b16 %v298, %v297
        %v316 = vpack.c.b16 %v300, %v299
        %v322 = vunpack.c.l.b16 %v232
        %v323 = vunpack.c.l.b16 %v233
        %v324 = vunpack.c.l.b16 %v234
        %v325 = vunpack.c.l.b16 %v235
        %v326 = vunpack.c.l.b16 %v236
        %v327 = vpack.c.b16 %v323, %v322
        %v328 = vpack.c.b16 %v325, %v324
        %v329 = vpack.c.b16 %v326, %v326
        %vm332 = vcmask 326656
        %v334 = vsel %vm332, %v301, 0
        %v337 = vsel %vm332, %v302, 0
        %v340 = vsel %vm332, %v303, 0
        %v343 = vsel %vm332, %v304, 0
        %v346 = vsel %vm332, %v305, 0
        %v349 = vsel %vm332, %v306, 0
        %v352 = vsel %vm332, %v307, 0
        %v355 = vsel %vm332, %v308, 0
        %v358 = vsel %vm332, %v309, 0
        %v361 = vsel %vm332, %v310, 0
        %v364 = vsel %vm332, %v311, 0
        %v367 = vsel %vm332, %v312, 0
        %v370 = vsel %vm332, %v313, 0
        %v373 = vsel %vm332, %v314, 0
        %v376 = vsel %vm332, %v315, 0
        %v379 = vsel %vm332, %v316, 0
        %vm381 = vcmask 1043456
        %v383 = vsel %vm381, %v329, 0
        %385 = vmatprep.subr.bf16.mxu0 0
        %386 = vmatpush1.bf16.msra.mxu0 %v327
        %387 = vmatprep.subr.bf16.mxu0 0
        %388 = vmatpush1.bf16.msra.mxu0 %v328
        %389 = vmatprep.subr.bf16.mxu0 0
        %390 = vmatpush1.bf16.msra.mxu0 %v383
        %391 = vmatprep.subr.bf16.mxu0 0
        %392 = vmatpush1.bf16.msra.mxu0 0
        %393 = vmatprep.subr.bf16.mxu0 0
        %394 = vmatpush1.bf16.msra.mxu0 0
        %395 = vmatprep.subr.bf16.mxu0 0
        %396 = vmatpush1.bf16.msra.mxu0 0
        %397 = vmatprep.subr.bf16.mxu0 0
        %398 = vmatpush1.bf16.msra.mxu0 0
        %399 = vmatprep.subr.bf16.mxu0 0
        %400 = vmatpush1.bf16.msra.mxu0 0
        %401 = vmatprep.subr.bf16.mxu0 0
        %402 = vmatpush1.bf16.msra.mxu0 0
        %403 = vmatprep.subr.bf16.mxu0 0
        %404 = vmatpush1.bf16.msra.mxu0 0
        %405 = vmatprep.subr.bf16.mxu0 0
        %406 = vmatpush1.bf16.msra.mxu0 0
        %407 = vmatprep.subr.bf16.mxu0 0
        %408 = vmatpush1.bf16.msra.mxu0 0
        %409 = vmatprep.subr.bf16.mxu0 0
        %410 = vmatpush1.bf16.msra.mxu0 0
        %411 = vmatprep.subr.bf16.mxu0 0
        %412 = vmatpush1.bf16.msra.mxu0 0
        %413 = vmatprep.subr.bf16.mxu0 0
        %414 = vmatpush1.bf16.msra.mxu0 0
        %415 = vmatprep.subr.bf16.mxu0 0
        %416 = vmatpush1.bf16.msra.mxu0 0
        %417 = vmatprep.mubr.bf16.mxu0 0
        %418 = vmatmul.mubr.bf16.gmra.mrb[0].mxu0 %v334
        %v419 = vpop.f32.mrb[0].mxu0
        %v420 = vadd.f32 0.0, %v419
        %v421 = vpop.f32.mrb[0].mxu0
        %v422 = vpop.f32.mrb[0].mxu0
        %v423 = vadd.f32 0.0, %v422
        %v424 = vpop.f32.mrb[0].mxu0
        %425 = vmatprep.mubr.bf16.mxu0 0
        %426 = vmatmul.mubr.bf16.gmra.mrb[0].mxu0 %v337
        %v427 = vpop.f32.mrb[0].mxu0
        %v428 = vadd.f32 0.0, %v427
        %v429 = vpop.f32.mrb[0].mxu0
        %v430 = vpop.f32.mrb[0].mxu0
        %v431 = vadd.f32 0.0, %v430
        %v432 = vpop.f32.mrb[0].mxu0
        %433 = vmatprep.mubr.bf16.mxu0 0
        %434 = vmatmul.mubr.bf16.gmra.mrb[0].mxu0 %v340
        %v435 = vpop.f32.mrb[0].mxu0
        %v436 = vadd.f32 0.0, %v435
        %v437 = vpop.f32.mrb[0].mxu0
        %v438 = vpop.f32.mrb[0].mxu0
        %v439 = vadd.f32 0.0, %v438
        %v440 = vpop.f32.mrb[0].mxu0
        %441 = vmatprep.mubr.bf16.mxu0 0
        %442 = vmatmul.mubr.bf16.gmra.mrb[0].mxu0 %v343
        %v443 = vpop.f32.mrb[0].mxu0
        %v444 = vadd.f32 0.0, %v443
        %v445 = vpop.f32.mrb[0].mxu0
        %v446 = vpop.f32.mrb[0].mxu0
        %v447 = vadd.f32 0.0, %v446
        %v448 = vpop.f32.mrb[0].mxu0
        %449 = vmatprep.mubr.bf16.mxu0 0
        %450 = vmatmul.mubr.bf16.gmra.mrb[0].mxu0 %v346
        %v451 = vpop.f32.mrb[0].mxu0
        %v452 = vadd.f32 0.0, %v451
        %v453 = vpop.f32.mrb[0].mxu0
        %v454 = vpop.f32.mrb[0].mxu0
        %v455 = vadd.f32 0.0, %v454
        %v456 = vpop.f32.mrb[0].mxu0
        %457 = vmatprep.mubr.bf16.mxu0 0
        %458 = vmatmul.mubr.bf16.gmra.mrb[0].mxu0 %v349
        %v459 = vpop.f32.mrb[0].mxu0
        %v460 = vadd.f32 0.0, %v459
        %v461 = vpop.f32.mrb[0].mxu0
        %v462 = vpop.f32.mrb[0].mxu0
        %v463 = vadd.f32 0.0, %v462
        %v464 = vpop.f32.mrb[0].mxu0
        %465 = vmatprep.mubr.bf16.mxu0 0
        %466 = vmatmul.mubr.bf16.gmra.mrb[0].mxu0 %v352
        %v467 = vpop.f32.mrb[0].mxu0
        %v468 = vadd.f32 0.0, %v467
        %v469 = vpop.f32.mrb[0].mxu0
        %v470 = vpop.f32.mrb[0].mxu0
        %v471 = vadd.f32 0.0, %v470
        %v472 = vpop.f32.mrb[0].mxu0
        %473 = vmatprep.mubr.bf16.mxu0 0
        %474 = vmatmul.mubr.bf16.gmra.mrb[0].mxu0 %v355
        %v475 = vpop.f32.mrb[0].mxu0
        %v476 = vadd.f32 0.0, %v475
        %v477 = vpop.f32.mrb[0].mxu0
        %v478 = vpop.f32.mrb[0].mxu0
        %v479 = vadd.f32 0.0, %v478
        %v480 = vpop.f32.mrb[0].mxu0
        %481 = vmatprep.mubr.bf16.mxu0 0
        %482 = vmatmul.mubr.bf16.gmra.mrb[0].mxu0 %v358
        %v483 = vpop.f32.mrb[0].mxu0
        %v484 = vadd.f32 0.0, %v483
        %v485 = vpop.f32.mrb[0].mxu0
        %v486 = vpop.f32.mrb[0].mxu0
        %v487 = vadd.f32 0.0, %v486
        %v488 = vpop.f32.mrb[0].mxu0
        %489 = vmatprep.mubr.bf16.mxu0 0
        %490 = vmatmul.mubr.bf16.gmra.mrb[0].mxu0 %v361
        %v491 = vpop.f32.mrb[0].mxu0
        %v492 = vadd.f32 0.0, %v491
        %v493 = vpop.f32.mrb[0].mxu0
        %v494 = vpop.f32.mrb[0].mxu0
        %v495 = vadd.f32 0.0, %v494
        %v496 = vpop.f32.mrb[0].mxu0
        %497 = vmatprep.mubr.bf16.mxu0 0
        %498 = vmatmul.mubr.bf16.gmra.mrb[0].mxu0 %v364
        %v499 = vpop.f32.mrb[0].mxu0
        %v500 = vadd.f32 0.0, %v499
        %v501 = vpop.f32.mrb[0].mxu0
        %v502 = vpop.f32.mrb[0].mxu0
        %v503 = vadd.f32 0.0, %v502
        %v504 = vpop.f32.mrb[0].mxu0
        %505 = vmatprep.mubr.bf16.mxu0 0
        %506 = vmatmul.mubr.bf16.gmra.mrb[0].mxu0 %v367
        %v507 = vpop.f32.mrb[0].mxu0
        %v508 = vadd.f32 0.0, %v507
        %v509 = vpop.f32.mrb[0].mxu0
        %v510 = vpop.f32.mrb[0].mxu0
        %v511 = vadd.f32 0.0, %v510
        %v512 = vpop.f32.mrb[0].mxu0
        %513 = vmatprep.mubr.bf16.mxu0 0
        %514 = vmatmul.mubr.bf16.gmra.mrb[0].mxu0 %v370
        %v515 = vpop.f32.mrb[0].mxu0
        %v516 = vadd.f32 0.0, %v515
        %v517 = vpop.f32.mrb[0].mxu0
        %v518 = vpop.f32.mrb[0].mxu0
        %v519 = vadd.f32 0.0, %v518
        %v520 = vpop.f32.mrb[0].mxu0
        %521 = vmatprep.mubr.bf16.mxu0 0
        %522 = vmatmul.mubr.bf16.gmra.mrb[0].mxu0 %v373
        %v523 = vpop.f32.mrb[0].mxu0
        %v524 = vadd.f32 0.0, %v523
        %v525 = vpop.f32.mrb[0].mxu0
        %v526 = vpop.f32.mrb[0].mxu0
        %v527 = vadd.f32 0.0, %v526
        %v528 = vpop.f32.mrb[0].mxu0
        %529 = vmatprep.mubr.bf16.mxu0 0
        %530 = vmatmul.mubr.bf16.gmra.mrb[0].mxu0 %v376
        %v531 = vpop.f32.mrb[0].mxu0
        %v532 = vadd.f32 0.0, %v531
        %v533 = vpop.f32.mrb[0].mxu0
        %v534 = vpop.f32.mrb[0].mxu0
        %v535 = vadd.f32 0.0, %v534
        %v536 = vpop.f32.mrb[0].mxu0
        %537 = vmatprep.mubr.bf16.mxu0 0
        %538 = vmatmul.mubr.bf16.gmra.mrb[0].mxu0 %v379
        %v539 = vpop.f32.mrb[0].mxu0
        %v540 = vadd.f32 0.0, %v539
        %v541 = vpop.f32.mrb[0].mxu0
        %v542 = vpop.f32.mrb[0].mxu0
        %v543 = vadd.f32 0.0, %v542
        %v544 = vpop.f32.mrb[0].mxu0
        %545 = vdwg.mxu0
        %v546 = vld [vmem:[%s2] sm:$0x1]
        %v548 = vlaneseq
        %v549 = vshrl.u32 %v548, 7
        %v550 = vsub.s32 0, %v549
        %v551 = vrot.slane %v546, %v550
        %v553 = vmul.f32 %v420, %v551
        %v554 = vmul.f32 %v423, %v551
        %v555 = vmul.f32 %v428, %v551
        %v556 = vmul.f32 %v431, %v551
        %v557 = vmul.f32 %v436, %v551
        %v558 = vmul.f32 %v439, %v551
        %v559 = vmul.f32 %v444, %v551
        %v560 = vmul.f32 %v447, %v551
        %v561 = vmul.f32 %v452, %v551
        %v562 = vmul.f32 %v455, %v551
        %v563 = vmul.f32 %v460, %v551
        %v564 = vmul.f32 %v463, %v551
        %v565 = vmul.f32 %v468, %v551
        %v566 = vmul.f32 %v471, %v551
        %v567 = vmul.f32 %v476, %v551
        %v568 = vmul.f32 %v479, %v551
        %v569 = vmul.f32 %v484, %v551
        %v570 = vmul.f32 %v487, %v551
        %v571 = vmul.f32 %v492, %v551
        %v572 = vmul.f32 %v495, %v551
        %v573 = vmul.f32 %v500, %v551
        %v574 = vmul.f32 %v503, %v551
        %v575 = vmul.f32 %v508, %v551
        %v576 = vmul.f32 %v511, %v551
        %v577 = vmul.f32 %v516, %v551
        %v578 = vmul.f32 %v519, %v551
        %v579 = vmul.f32 %v524, %v551
        %v580 = vmul.f32 %v527, %v551
        %v581 = vmul.f32 %v532, %v551
        %v582 = vmul.f32 %v535, %v551
        %v583 = vmul.f32 %v540, %v551
        %v584 = vmul.f32 %v543, %v551
        %v585 = vld [vmem:[%s3] sm:$0x1]
        %v587 = vlaneseq
        %v588 = vshrl.u32 %v587, 7
        %v589 = vsub.s32 0, %v588
        %v590 = vrot.slane %v585, %v589
        %v592 = vadd.f32 %v553, %v590
        %v593 = vadd.f32 %v554, %v590
        %v594 = vadd.f32 %v555, %v590
        %v595 = vadd.f32 %v556, %v590
        %v596 = vadd.f32 %v557, %v590
        %v597 = vadd.f32 %v558, %v590
        %v598 = vadd.f32 %v559, %v590
        %v599 = vadd.f32 %v560, %v590
        %v600 = vadd.f32 %v561, %v590
        %v601 = vadd.f32 %v562, %v590
        %v602 = vadd.f32 %v563, %v590
        %v603 = vadd.f32 %v564, %v590
        %v604 = vadd.f32 %v565, %v590
        %v605 = vadd.f32 %v566, %v590
        %v606 = vadd.f32 %v567, %v590
        %v607 = vadd.f32 %v568, %v590
        %v608 = vadd.f32 %v569, %v590
        %v609 = vadd.f32 %v570, %v590
        %v610 = vadd.f32 %v571, %v590
        %v611 = vadd.f32 %v572, %v590
        %v612 = vadd.f32 %v573, %v590
        %v613 = vadd.f32 %v574, %v590
        %v614 = vadd.f32 %v575, %v590
        %v615 = vadd.f32 %v576, %v590
        %v616 = vadd.f32 %v577, %v590
        %v617 = vadd.f32 %v578, %v590
        %v618 = vadd.f32 %v579, %v590
        %v619 = vadd.f32 %v580, %v590
        %v620 = vadd.f32 %v581, %v590
        %v621 = vadd.f32 %v582, %v590
        %v622 = vadd.f32 %v583, %v590
        %v623 = vadd.f32 %v584, %v590
        %v624 = vmax.f32 %v592, 0.0
        %v625 = vmax.f32 %v593, 0.0
        %v626 = vmax.f32 %v594, 0.0
        %v627 = vmax.f32 %v595, 0.0
        %v628 = vmax.f32 %v596, 0.0
        %v629 = vmax.f32 %v597, 0.0
        %v630 = vmax.f32 %v598, 0.0
        %v631 = vmax.f32 %v599, 0.0
        %v632 = vmax.f32 %v600, 0.0
        %v633 = vmax.f32 %v601, 0.0
        %v634 = vmax.f32 %v602, 0.0
        %v635 = vmax.f32 %v603, 0.0
        %v636 = vmax.f32 %v604, 0.0
        %v637 = vmax.f32 %v605, 0.0
        %v638 = vmax.f32 %v606, 0.0
        %v639 = vmax.f32 %v607, 0.0
        %v640 = vmax.f32 %v608, 0.0
        %v641 = vmax.f32 %v609, 0.0
        %v642 = vmax.f32 %v610, 0.0
        %v643 = vmax.f32 %v611, 0.0
        %v644 = vmax.f32 %v612, 0.0
        %v645 = vmax.f32 %v613, 0.0
        %v646 = vmax.f32 %v614, 0.0
        %v647 = vmax.f32 %v615, 0.0
        %v648 = vmax.f32 %v616, 0.0
        %v649 = vmax.f32 %v617, 0.0
        %v650 = vmax.f32 %v618, 0.0
        %v651 = vmax.f32 %v619, 0.0
        %v652 = vmax.f32 %v620, 0.0
        %v653 = vmax.f32 %v621, 0.0
        %v654 = vmax.f32 %v622, 0.0
        %v655 = vmax.f32 %v623, 0.0
        %656 = vst [vmem:[%s191] sm:$0xff] %v624
        %657 = vst [vmem:[%s191 + $0x8] sm:$0xff] %v625
        %658 = vst [vmem:[%s191 + $0x10] sm:$0xff] %v626
        %659 = vst [vmem:[%s191 + $0x18] sm:$0xff] %v627
        %660 = vst [vmem:[%s191 + $0x20] sm:$0xff] %v628
        %661 = vst [vmem:[%s191 + $0x28] sm:$0xff] %v629
        %662 = vst [vmem:[%s191 + $0x30] sm:$0xff] %v630
        %663 = vst [vmem:[%s191 + $0x38] sm:$0xff] %v631
        %664 = vst [vmem:[%s191 + $0x40] sm:$0xff] %v632
        %665 = vst [vmem:[%s191 + $0x48] sm:$0xff] %v633
        %666 = vst [vmem:[%s191 + $0x50] sm:$0xff] %v634
        %667 = vst [vmem:[%s191 + $0x58] sm:$0xff] %v635
        %668 = vst [vmem:[%s191 + $0x60] sm:$0xff] %v636
        %669 = vst [vmem:[%s191 + $0x68] sm:$0xff] %v637
        %670 = vst [vmem:[%s191 + $0x70] sm:$0xff] %v638
        %671 = vst [vmem:[%s191 + $0x78] sm:$0xff] %v639
        %672 = vst [vmem:[%s191 + $0x80] sm:$0xff] %v640
        %673 = vst [vmem:[%s191 + $0x88] sm:$0xff] %v641
        %674 = vst [vmem:[%s191 + $0x90] sm:$0xff] %v642
        %675 = vst [vmem:[%s191 + $0x98] sm:$0xff] %v643
        %676 = vst [vmem:[%s191 + $0xa0] sm:$0xff] %v644
        %677 = vst [vmem:[%s191 + $0xa8] sm:$0xff] %v645
        %678 = vst [vmem:[%s191 + $0xb0] sm:$0xff] %v646
        %679 = vst [vmem:[%s191 + $0xb8] sm:$0xff] %v647
        %680 = vst [vmem:[%s191 + $0xc0] sm:$0xff] %v648
        %681 = vst [vmem:[%s191 + $0xc8] sm:$0xff] %v649
        %682 = vst [vmem:[%s191 + $0xd0] sm:$0xff] %v650
        %683 = vst [vmem:[%s191 + $0xd8] sm:$0xff] %v651
        %684 = vst [vmem:[%s191 + $0xe0] sm:$0xff] %v652
        %685 = vst [vmem:[%s191 + $0xe8] sm:$0xff] %v653
        %686 = vst [vmem:[%s191 + $0xf0] sm:$0xff] %v654
        %687 = vst [vmem:[%s191 + $0xf8] sm:$0xff] %v655
        %s688 = sand.u32 %s115, 1
        %s689 = scalar_lea.sflag [#allocation3], %s688
        %s690 = sand.u32 %s115, 1
        %s691 = smul.addr %s690, 256
        %s692 = scalar_lea.vmem [#allocation2], %s691
        // Predicated region
        $region37: #{tpu_custom_call.1} parent=35 // pred_check
          %p693 = pneg %p125
        $region38: #{tpu_custom_call.1} parent=35 // pred_check_branch
          %695 = sbr.rel (%p693) target = $region40
        $region39: #{tpu_custom_call.1} parent=35 // pred_region
          %s696 = smul.u32 32, %s18
          %s698 = ssub.s32 4096, 4096
          %699 = vsyncadd %s689, %s698
          %s700 = smul.addr %s696, 128
          %s701 = scalar_lea.hbm %s4, %s700
          %s702 = sshll.u32 %s692, 4
          %s703 = int_to_ptr.vmem [resolvable:$true] %s702
          %708 = dma.vmem_to_hbm [thread:$0]  %s703, 4096, %s701, %s689, 128, 128, 8
        $region40: #{tpu_custom_call.1} parent=35 // pred_fallthru
          _
      $region36: #{tpu_custom_call.1} parent=5 // pred_fallthru
        _
      %p709 = scmp.le.s32.totalorder 2, %s13
      // Predicated region
      $region41: #{tpu_custom_call.1} parent=5 // pred_check
        %p710 = pneg %p709
      $region42: #{tpu_custom_call.1} parent=5 // pred_check_branch
        %712 = sbr.rel (%p710) target = $region44
      $region43: #{tpu_custom_call.1} parent=5 // pred_region
        %s713 = ssub.s32 %s13, 2
        // Predicated region
        $region45: #{tpu_custom_call.1} parent=43 // pred_check
          %p714 = pneg %p131
        $region46: #{tpu_custom_call.1} parent=43 // pred_check_branch
          %716 = sbr.rel (%p714) target = $region48
        $region47: #{tpu_custom_call.1} parent=43 // pred_region
          %s717 = sand.u32 %s116, 1
          %s718 = scalar_lea.sflag [#allocation3], %s717
          %s719 = sand.u32 %s116, 1
          %s720 = smul.addr %s719, 256
          %s721 = scalar_lea.vmem [#allocation2], %s720
          %722 = dma.done %s718, 4096
        $region48: #{tpu_custom_call.1} parent=43 // pred_fallthru
          _
      $region44: #{tpu_custom_call.1} parent=5 // pred_fallthru
        _
    $region6: #{tpu_custom_call.1} parent=1 // loop_footer
      %s17 = sadd.s32 1, %s13
    $region7: #{tpu_custom_call.1} parent=1 // loop_footer_branch
      %12 = sbr.rel target = $region3
    $region8: #{tpu_custom_call.1} parent=1 // loop_exit
      _
    %723 = vsyncpa [#allocation3], 1
    %s724 = scalar_lea.sflag [#allocation3], 1
    %725 = vsyncpa %s724, 1

</llo_original>
